<compile_context>
chip_gen: v7x
topology: tpu7x:2x2x1
jax: 0.10.0
libtpu: 0.0.40
codegen_flags: <defaults>
</compile_context>

<pallas_src>
import functools

import jax
import jax.numpy as jnp
from jax import lax
from jax.experimental import pallas as pl
from jax.experimental.pallas import tpu as pltpu

EPS = 1e-6  # matches nn.LayerNorm(hidden_dim, eps=1e-06)


def sublayer_connection_kernel(layer_ref, sub_ref, gamma_ref, beta_ref, o_ref, *, inv_h):
    # layer_ref, sub_ref, o_ref : (tile_rows, H_pad)
    # gamma_ref, beta_ref       : (1, H_pad)   (zero-padded past the true H)
    x = sub_ref[...].astype(jnp.float32)

    # Single-pass LayerNorm statistics over the last axis. Padded lanes hold
    # zeros, so the sums are unaffected; divide by the true H (inv_h).
    s = jnp.sum(x, axis=-1, keepdims=True)
    ss = jnp.sum(x * x, axis=-1, keepdims=True)
    mean = s * inv_h
    var = jnp.maximum(ss * inv_h - mean * mean, 0.0)  # biased variance, as in nn.LayerNorm
    inv_std = lax.rsqrt(var + EPS)                    # EUP rsqrt

    normed = (x - mean) * inv_std
    normed = normed * gamma_ref[...].astype(jnp.float32) + beta_ref[...].astype(jnp.float32)

    # Dropout (eval mode) is identity; residual add.
    # TODO(synk): training-mode dropout could be added with pltpu.prng_random_bits.
    out = layer_ref[...].astype(jnp.float32) + normed
    o_ref[...] = out.astype(o_ref.dtype)


def _pick_tile_rows(rows, h_pad, io_bytes, tile_budget_bytes):
    # Per-step VMEM ≈ 3 io arrays × 2 pipeline buffers × io dtype
    #               + ~4 f32-sized in-kernel temporaries, all (tile_rows, h_pad).
    per_row = h_pad * (3 * 2 * io_bytes + 4 * 4)
    t = tile_budget_bytes // per_row
    t = max(8, min(int(t), 2048))
    t = (t // 8) * 8                        # sublane multiple
    t = min(t, ((rows + 7) // 8) * 8)       # no need to exceed total rows
    return max(t, 8)


def sublayer_connection(layer, sublayer, gamma, beta):
    """layer, sublayer: (B, S, H); gamma, beta: (H,). Returns (B, S, H)."""
    B, S, H = layer.shape
    rows = B * S
    io_bytes = jnp.dtype(layer.dtype).itemsize

    # Lane-dense last dim: pad H up to a multiple of 128.
    H_pad = max(128, ((H + 127) // 128) * 128)

    # Generation-aware VMEM budget (v7x: 64 MiB physical, v5e/v6e: 128 MiB).
    try:
        vmem_cap = int(pltpu.get_tpu_info().vmem_capacity_bytes)
    except Exception:
        vmem_cap = 64 << 20  # conservative (v7x) fallback
    vmem_limit = min(int(vmem_cap * 0.70), 96 << 20)
    tile_rows = _pick_tile_rows(rows, H_pad, io_bytes, tile_budget_bytes=vmem_limit // 2)

    grid = pl.cdiv(rows, tile_rows)
    rows_pad = grid * tile_rows

    layer2d = layer.reshape(rows, H)
    sub2d = sublayer.reshape(rows, H)
    gamma2d = gamma.reshape(1, H)
    beta2d = beta.reshape(1, H)

    if H_pad != H or rows_pad != rows:
        layer2d = jnp.pad(layer2d, ((0, rows_pad - rows), (0, H_pad - H)))
        sub2d = jnp.pad(sub2d, ((0, rows_pad - rows), (0, H_pad - H)))
        gamma2d = jnp.pad(gamma2d, ((0, 0), (0, H_pad - H)))
        beta2d = jnp.pad(beta2d, ((0, 0), (0, H_pad - H)))

    kernel = functools.partial(sublayer_connection_kernel, inv_h=1.0 / float(H))

    cost = pl.CostEstimate(
        flops=10 * rows_pad * H_pad,
        transcendentals=rows_pad,
        bytes_accessed=3 * rows_pad * H_pad * io_bytes,
    )

    out2d = pl.pallas_call(
        kernel,
        out_shape=jax.ShapeDtypeStruct((rows_pad, H_pad), layer.dtype),
        grid_spec=pltpu.PrefetchScalarGridSpec(
            num_scalar_prefetch=0,
            grid=(grid,),
            in_specs=[
                pl.BlockSpec((tile_rows, H_pad), lambda i: (i, 0)),  # layer
                pl.BlockSpec((tile_rows, H_pad), lambda i: (i, 0)),  # sublayer
                pl.BlockSpec((1, H_pad), lambda i: (0, 0)),          # gamma
                pl.BlockSpec((1, H_pad), lambda i: (0, 0)),          # beta
            ],
            out_specs=pl.BlockSpec((tile_rows, H_pad), lambda i: (i, 0)),
        ),
        compiler_params=pltpu.CompilerParams(
            dimension_semantics=("parallel",),   # row tiles shard across v7x's 2 TCs
            vmem_limit_bytes=vmem_limit,
        ),
        cost_estimate=cost,
    )(layer2d, sub2d, gamma2d, beta2d)

    return out2d[:rows, :H].reshape(B, S, H)


def _reference(layer, sublayer, gamma, beta):
    mean = jnp.mean(sublayer, axis=-1, keepdims=True)
    var = jnp.mean((sublayer - mean) ** 2, axis=-1, keepdims=True)
    normed = (sublayer - mean) / jnp.sqrt(var + EPS) * gamma + beta
    return layer + normed


if __name__ == "__main__":
    key = jax.random.PRNGKey(0)

    # Case 1: module-sized demo (H=32 exercises the lane-padding path).
    B, S, H = 2, 8, 32
    k1, k2, key = jax.random.split(key, 3)
    layer = jax.random.normal(k1, (B, S, H), dtype=jnp.float32)
    sublayer = jax.random.normal(k2, (B, S, H), dtype=jnp.float32)
    gamma = jnp.ones((H,), dtype=jnp.float32)   # PyTorch LayerNorm default init
    beta = jnp.zeros((H,), dtype=jnp.float32)

    out = jax.block_until_ready(sublayer_connection(layer, sublayer, gamma, beta))
    ref = _reference(layer, sublayer, gamma, beta)
    assert out.shape == ref.shape
    assert jnp.allclose(out, ref, atol=1e-4, rtol=1e-4), "mismatch vs reference (case 1)"

    # Case 2: lane-dense H (no padding) with non-trivial gamma/beta.
    B, S, H = 2, 24, 128
    k1, k2, k3, k4, key = jax.random.split(key, 5)
    layer = jax.random.normal(k1, (B, S, H), dtype=jnp.float32)
    sublayer = jax.random.normal(k2, (B, S, H), dtype=jnp.float32)
    gamma = 1.0 + 0.1 * jax.random.normal(k3, (H,), dtype=jnp.float32)
    beta = 0.1 * jax.random.normal(k4, (H,), dtype=jnp.float32)

    out = jax.block_until_ready(sublayer_connection(layer, sublayer, gamma, beta))
    ref = _reference(layer, sublayer, gamma, beta)
    assert jnp.allclose(out, ref, atol=1e-4, rtol=1e-4), "mismatch vs reference (case 2)"

    print("KERNEL_OK")
</pallas_src>

<mosaic_0001>
module attributes {stable_mosaic.version = 11 : i64} {
  func.func @sublayer_connection_kernel(%arg0: i32, %arg1: memref<16x128xf32, #tpu.memory_space<vmem>>, %arg2: memref<16x128xf32, #tpu.memory_space<vmem>>, %arg3: memref<1x128xf32, #tpu.memory_space<vmem>>, %arg4: memref<1x128xf32, #tpu.memory_space<vmem>>, %arg5: memref<16x128xf32, #tpu.memory_space<vmem>>) attributes {dimension_semantics = [#tpu.dimension_semantics<parallel>], iteration_bounds = array<i64: 1>, scalar_prefetch = 0 : i64, scratch_operands = 0 : i64, tpu.core_type = #tpu.core_type<tc>, window_params = [{transform_indices = @transform_0, window_bounds = array<i64: 16, 128>}, {transform_indices = @transform_1, window_bounds = array<i64: 16, 128>}, {pipeline_mode = #tpu.pipeline_mode<synchronous>, transform_indices = @transform_2, window_bounds = array<i64: 1, 128>}, {pipeline_mode = #tpu.pipeline_mode<synchronous>, transform_indices = @transform_3, window_bounds = array<i64: 1, 128>}, {transform_indices = @transform_4, window_bounds = array<i64: 16, 128>}]} {
    %c0 = arith.constant 0 : index
    %c0_0 = arith.constant 0 : index
    %0 = vector.load %arg2[%c0, %c0_0] : memref<16x128xf32, #tpu.memory_space<vmem>>, vector<16x128xf32>
    %cst = arith.constant dense<0.000000e+00> : vector<16xf32>
    %1 = vector.multi_reduction <add>, %0, %cst [1] : vector<16x128xf32> to vector<16xf32>
    %2 = vector.shape_cast %1 : vector<16xf32> to vector<16x1xf32>
    %3 = arith.mulf %0, %0 : vector<16x128xf32>
    %cst_1 = arith.constant dense<0.000000e+00> : vector<16xf32>
    %4 = vector.multi_reduction <add>, %3, %cst_1 [1] : vector<16x128xf32> to vector<16xf32>
    %5 = vector.shape_cast %4 : vector<16xf32> to vector<16x1xf32>
    %cst_2 = arith.constant 3.125000e-02 : f32
    %6 = vector.broadcast %cst_2 : f32 to vector<16x1xf32>
    %7 = arith.mulf %2, %6 : vector<16x1xf32>
    %cst_3 = arith.constant 3.125000e-02 : f32
    %8 = vector.broadcast %cst_3 : f32 to vector<16x1xf32>
    %9 = arith.mulf %5, %8 : vector<16x1xf32>
    %10 = arith.mulf %7, %7 : vector<16x1xf32>
    %11 = arith.subf %9, %10 : vector<16x1xf32>
    %cst_4 = arith.constant 0.000000e+00 : f32
    %12 = vector.broadcast %cst_4 : f32 to vector<16x1xf32>
    %13 = arith.maximumf %11, %12 : vector<16x1xf32>
    %cst_5 = arith.constant 9.99999997E-7 : f32
    %14 = vector.broadcast %cst_5 : f32 to vector<16x1xf32>
    %15 = arith.addf %13, %14 : vector<16x1xf32>
    %16 = math.rsqrt %15 : vector<16x1xf32>
    %17 = vector.broadcast %7 : vector<16x1xf32> to vector<16x128xf32>
    %18 = arith.subf %0, %17 : vector<16x128xf32>
    %19 = vector.broadcast %16 : vector<16x1xf32> to vector<16x128xf32>
    %20 = arith.mulf %18, %19 : vector<16x128xf32>
    %c0_6 = arith.constant 0 : index
    %c0_7 = arith.constant 0 : index
    %21 = vector.load %arg3[%c0_6, %c0_7] : memref<1x128xf32, #tpu.memory_space<vmem>>, vector<1x128xf32>
    %22 = vector.broadcast %21 : vector<1x128xf32> to vector<16x128xf32>
    %23 = arith.mulf %20, %22 : vector<16x128xf32>
    %c0_8 = arith.constant 0 : index
    %c0_9 = arith.constant 0 : index
    %24 = vector.load %arg4[%c0_8, %c0_9] : memref<1x128xf32, #tpu.memory_space<vmem>>, vector<1x128xf32>
    %25 = vector.broadcast %24 : vector<1x128xf32> to vector<16x128xf32>
    %26 = arith.addf %23, %25 : vector<16x128xf32>
    %c0_10 = arith.constant 0 : index
    %c0_11 = arith.constant 0 : index
    %27 = vector.load %arg1[%c0_10, %c0_11] : memref<16x128xf32, #tpu.memory_space<vmem>>, vector<16x128xf32>
    %28 = arith.addf %27, %26 : vector<16x128xf32>
    %c0_12 = arith.constant 0 : index
    %c0_13 = arith.constant 0 : index
    %29 = vector.load %arg5[%c0_12, %c0_13] : memref<16x128xf32, #tpu.memory_space<vmem>>, vector<16x128xf32>
    tpu.vector_store %arg5[%c0_12, %c0_13], %28 {strides = array<i32>} : memref<16x128xf32, #tpu.memory_space<vmem>>, vector<16x128xf32>,
    return
  }
  func.func @transform_0(%arg0: i32) -> (i32, i32) {
    %c0_i32 = arith.constant 0 : i32
    %c0_i32_0 = arith.constant 0 : i32
    return %arg0, %c0_i32 : i32, i32
  }
  func.func @transform_1(%arg0: i32) -> (i32, i32) {
    %c0_i32 = arith.constant 0 : i32
    %c0_i32_0 = arith.constant 0 : i32
    return %arg0, %c0_i32 : i32, i32
  }
  func.func @transform_2(%arg0: i32) -> (i32, i32) {
    %c0_i32 = arith.constant 0 : i32
    %c0_i32_0 = arith.constant 0 : i32
    %c0_i32_1 = arith.constant 0 : i32
    return %c0_i32, %c0_i32_0 : i32, i32
  }
  func.func @transform_3(%arg0: i32) -> (i32, i32) {
    %c0_i32 = arith.constant 0 : i32
    %c0_i32_0 = arith.constant 0 : i32
    %c0_i32_1 = arith.constant 0 : i32
    return %c0_i32, %c0_i32_0 : i32, i32
  }
  func.func @transform_4(%arg0: i32) -> (i32, i32) {
    %c0_i32 = arith.constant 0 : i32
    %c0_i32_0 = arith.constant 0 : i32
    return %arg0, %c0_i32 : i32, i32
  }
}

</mosaic_0001>

<llo_original>
// kernel: tpu_custom_call.1
$region0: #{tpu_custom_call.1}
  #allocation0 [shape = 'u32[]', space=smem, size = 0x4, offset = 0x4, fixed_abs, tag = 'smem constant byte address 0x4 - core index']
  #allocation1 [shape = 'u32[144,128]{1,0:T(1,128)}', space=vmem, size = 0x12000, scoped, tag = 'internal scratch']
  %s0 = inlined_call_operand.hbm [shape: f32[16,128], index: 0, kind: input, shape index: {}]
  %s1 = inlined_call_operand.hbm [shape: f32[16,128], index: 1, kind: input, shape index: {}]
  %s2 = inlined_call_operand.vmem [shape: f32[1,128], index: 2, kind: input, shape index: {}]
  %s3 = inlined_call_operand.vmem [shape: f32[1,128], index: 3, kind: input, shape index: {}]
  %s4 = inlined_call_operand.hbm [shape: f32[16,128], index: 4, kind: output, shape index: {}]
  %s5 = sld [smem:[#allocation0]]
  $region34: #{tpu_custom_call.1} parent=0
    _
  %s7 = ssub.s32 1, %s5
  %s8 = scalar_select 0, %s7, %s5
  $region1: #{tpu_custom_call.1} parent=0
    #allocation2 [shape = 'u8[8192]{0}', space=vmem, size = 0x2000, scoped, tag = 'input window, operand 0, single buffered']
    #allocation3 [shape = 's32[1]{0}', space=sflag, size = 0x4, scoped, tag = 'scoped memory for tpu_custom_call.1']
    #allocation4 [shape = 's32[1]{0}', space=sflag, size = 0x4, scoped, tag = 'scoped memory for tpu_custom_call.1']
    #allocation5 [shape = 'u8[8192]{0}', space=vmem, size = 0x2000, scoped, tag = 'input window, operand 1, single buffered']
    #allocation6 [shape = 's32[1]{0}', space=sflag, size = 0x4, scoped, tag = 'scoped memory for tpu_custom_call.1']
    #allocation7 [shape = 'u8[8192]{0}', space=vmem, size = 0x2000, scoped, tag = 'output window, operand 0, single buffered']
    %9 = vsyncpa [#allocation3], 0
    %10 = vsyncpa [#allocation6], 0
    %11 = vsyncpa [#allocation4], 0
    // Predicated region
    $region2: #{tpu_custom_call.1} parent=1 // pred_check
      _
    $region3: #{tpu_custom_call.1} parent=1 // pred_check_branch
      %13 = sbr.rel (0) target = $region5
    $region4: #{tpu_custom_call.1} parent=1 // pred_region
      %s15 = ssub.s32 256, 256
      %16 = vsyncadd [#allocation3], %s15
      %s17 = sshll.u32 [#allocation2], 4
      %s18 = int_to_ptr.vmem [resolvable:$true] %s17
      %23 = dma.hbm_to_vmem [thread:$0]  %s0, 256, %s18, [#allocation3], 128, 128, 8
    $region5: #{tpu_custom_call.1} parent=1 // pred_fallthru
      _
    // Predicated region
    $region6: #{tpu_custom_call.1} parent=1 // pred_check
      _
    $region7: #{tpu_custom_call.1} parent=1 // pred_check_branch
      %25 = sbr.rel (0) target = $region9
    $region8: #{tpu_custom_call.1} parent=1 // pred_region
      %s27 = ssub.s32 256, 256
      %28 = vsyncadd [#allocation6], %s27
      %s29 = sshll.u32 [#allocation5], 4
      %s30 = int_to_ptr.vmem [resolvable:$true] %s29
      %35 = dma.hbm_to_vmem [thread:$0]  %s1, 256, %s30, [#allocation6], 128, 128, 8
    $region9: #{tpu_custom_call.1} parent=1 // pred_fallthru
      _
    // Predicated region
    $region10: #{tpu_custom_call.1} parent=1 // pred_check
      _
    $region11: #{tpu_custom_call.1} parent=1 // pred_check_branch
      %37 = sbr.rel (0) target = $region13
    $region12: #{tpu_custom_call.1} parent=1 // pred_region
      _
    $region13: #{tpu_custom_call.1} parent=1 // pred_fallthru
      _
    // Predicated region
    $region14: #{tpu_custom_call.1} parent=1 // pred_check
      _
    $region15: #{tpu_custom_call.1} parent=1 // pred_check_branch
      %39 = sbr.rel (0) target = $region17
    $region16: #{tpu_custom_call.1} parent=1 // pred_region
      _
    $region17: #{tpu_custom_call.1} parent=1 // pred_fallthru
      _
    // Predicated region
    $region18: #{tpu_custom_call.1} parent=1 // pred_check
      _
    $region19: #{tpu_custom_call.1} parent=1 // pred_check_branch
      %41 = sbr.rel (0) target = $region21
    $region20: #{tpu_custom_call.1} parent=1 // pred_region
      %42 = dma.done [#allocation3], 256
    $region21: #{tpu_custom_call.1} parent=1 // pred_fallthru
      _
    // Predicated region
    $region22: #{tpu_custom_call.1} parent=1 // pred_check
      _
    $region23: #{tpu_custom_call.1} parent=1 // pred_check_branch
      %44 = sbr.rel (0) target = $region25
    $region24: #{tpu_custom_call.1} parent=1 // pred_region
      %45 = dma.done [#allocation6], 256
    $region25: #{tpu_custom_call.1} parent=1 // pred_fallthru
      _
    %v46 = vld [vmem:[#allocation5] sm:$0xff]
    %v47 = vld [vmem:[#allocation5 + $0x8] sm:$0xff]
    %48 = vadd.xlane.f32.xlu0 %v46
    %v49 = vpop.xlane.xlu0 %48
    %50 = vadd.xlane.f32.xlu0 %v47
    %v51 = vpop.xlane.xlu0 %50
    %v52 = vmul.f32 %v46, %v46
    %v53 = vmul.f32 %v47, %v47
    %54 = vadd.xlane.f32.xlu0 %v52
    %v55 = vpop.xlane.xlu0 %54
    %56 = vadd.xlane.f32.xlu0 %v53
    %v57 = vpop.xlane.xlu0 %56
    %v58 = vmul.f32 %v49, 0.03125
    %v59 = vmul.f32 %v51, 0.03125
    %v60 = vmul.f32 %v55, 0.03125
    %v61 = vmul.f32 %v57, 0.03125
    %v62 = vmul.f32 %v58, %v58
    %v63 = vmul.f32 %v59, %v59
    %v64 = vsub.f32 %v60, %v62
    %v65 = vsub.f32 %v61, %v63
    %v66 = vmax.f32 %v64, 0.0
    %v67 = vmax.f32 %v65, 0.0
    %v68 = vadd.f32 %v66, 1e-06
    %v69 = vadd.f32 %v67, 1e-06
    %v70 = vrsqrt.pop %v68
    %v71 = vrsqrt.pop %v69
    %v72 = vsub.f32 %v46, %v58
    %v73 = vsub.f32 %v47, %v59
    %v74 = vmul.f32 %v72, %v70
    %v75 = vmul.f32 %v73, %v71
    %v76 = vld [vmem:[%s2] sm:$0x1]
    %v78 = vlaneseq
    %v79 = vshrl.u32 %v78, 7
    %v80 = vsub.s32 0, %v79
    %v81 = vrot.slane %v76, %v80
    %v83 = vmul.f32 %v74, %v81
    %v84 = vmul.f32 %v75, %v81
    %v85 = vld [vmem:[%s3] sm:$0x1]
    %v87 = vlaneseq
    %v88 = vshrl.u32 %v87, 7
    %v89 = vsub.s32 0, %v88
    %v90 = vrot.slane %v85, %v89
    %v92 = vadd.f32 %v83, %v90
    %v93 = vadd.f32 %v84, %v90
    %v94 = vld [vmem:[#allocation2] sm:$0xff]
    %v95 = vld [vmem:[#allocation2 + $0x8] sm:$0xff]
    %v96 = vadd.f32 %v94, %v92
    %v97 = vadd.f32 %v95, %v93
    %98 = vst [vmem:[#allocation7] sm:$0xff] %v96
    %99 = vst [vmem:[#allocation7 + $0x8] sm:$0xff] %v97
    // Predicated region
    $region26: #{tpu_custom_call.1} parent=1 // pred_check
      _
    $region27: #{tpu_custom_call.1} parent=1 // pred_check_branch
      %101 = sbr.rel (0) target = $region29
    $region28: #{tpu_custom_call.1} parent=1 // pred_region
      %s103 = ssub.s32 256, 256
      %104 = vsyncadd [#allocation4], %s103
      %s105 = sshll.u32 [#allocation7], 4
      %s106 = int_to_ptr.vmem [resolvable:$true] %s105
      %111 = dma.vmem_to_hbm [thread:$0]  %s106, 256, %s4, [#allocation4], 128, 128, 8
    $region29: #{tpu_custom_call.1} parent=1 // pred_fallthru
      _
    // Predicated region
    $region30: #{tpu_custom_call.1} parent=1 // pred_check
      _
    $region31: #{tpu_custom_call.1} parent=1 // pred_check_branch
      %113 = sbr.rel (0) target = $region33
    $region32: #{tpu_custom_call.1} parent=1 // pred_region
      %114 = dma.done [#allocation4], 256
    $region33: #{tpu_custom_call.1} parent=1 // pred_fallthru
      _
    %115 = vsyncpa [#allocation3], 1
    %116 = vsyncpa [#allocation6], 1
    %117 = vsyncpa [#allocation4], 1

</llo_original>
